<compile_context>
chip_gen: v7x
topology: tpu7x:2x2x1
jax: 0.10.0
libtpu: 0.0.40
codegen_flags: <defaults>
</compile_context>

<pallas_src>
import math

import jax
import jax.numpy as jnp
import numpy as np
from jax.experimental import pallas as pl
from jax.experimental.pallas import tpu as pltpu

ENC_DIM = 128                 # enc_dim in the PyTorch module
HALF_DIM = ENC_DIM // 2       # Gaussian Fourier half width (64)
FUSED_DIM = 2 * ENC_DIM       # concatenated embedding width (256)
INPUT_SIZE = 12               # x (3) + R.reshape(B, 9)
PACKED_IN = 16                # [x | R | k | zero-pad] lanes per input row
OUTPUT_SIZE = 6               # energy=False branch
SIGMA = 0.5
LOG_SIGMA = math.log(SIGMA)
TWO_PI = 2.0 * math.pi


def _round_up(n, m):
    return ((n + m - 1) // m) * m


def se3dif_kernel(
    xrk_ref,    # (TB, 16)   f32  [x | R.flat | k | zero-pad]
    wgfp_ref,   # (1, 128)   f32  [W_gfp | W_gfp] duplicated Fourier weights
    phase_ref,  # (1, 128)   f32  [0]*64 + [pi/2]*64
    wex_ref,    # (16, 256)  bf16 fused x_embed weight (rows 0:12, cols 0:128 live)
    wet_ref,    # (128, 256) bf16 fused time_embed weight (cols 128:256 live)
    bemb_ref,   # (1, 256)   f32  [bx | bt]
    w1_ref,     # (256, 128) bf16 network[0] weight^T (unsplit)
    b1_ref,     # (1, 128)   f32
    w2_ref,     # (128, 256) bf16 network[2] weight^T
    b2_ref,     # (1, 256)   f32
    w3_ref,     # (256, 128) bf16 network[4] weight^T, zero-padded to 128 lanes
    b3_ref,     # (1, 128)   f32  zero-padded bias
    out_ref,    # (TB, 128)  bf16 lane-dense output; columns 0:6 hold the result
):
    f32 = jnp.float32
    bf16 = jnp.bfloat16

    xrk = xrk_ref[...]                                       # (TB, 16) f32

    # Extract k (lane 12) via a lane-masked reduce (no unaligned lane slice).
    lane = jax.lax.broadcasted_iota(jnp.int32, xrk.shape, 1)
    k = jnp.sum(jnp.where(lane == INPUT_SIZE, xrk, 0.0),
                axis=-1, keepdims=True)                      # (TB, 1) f32

    # 1 / std^2, std^2 = (sigma^(2k) - 1) / (2 ln sigma).  Computed up front so
    # the EUP reciprocal latency hides under the matmul chain.
    denom = jnp.exp((2.0 * LOG_SIGMA) * k) - 1.0             # (TB, 1)
    inv_std2 = (2.0 * LOG_SIGMA) * pl.reciprocal(denom, approx=True)

    # GaussianFourierProjection: single phase-shifted sin (cos(x) = sin(x+pi/2)),
    # correct because W is duplicated over both lane halves in wgfp_ref.
    feat = jnp.sin(k * (wgfp_ref[...] * TWO_PI) + phase_ref[...])   # (TB, 128) f32

    # Fused embeddings: z256 = [x_embed_pre | time_embed_pre]. bf16 MXU operands,
    # f32 accumulation/bias/activation.  Rows 12:16 of wex are zero, so k and the
    # padding lanes never leak into x_embed.
    z256 = (
        jnp.dot(xrk.astype(bf16), wex_ref[...], preferred_element_type=f32)
        + jnp.dot(feat.astype(bf16), wet_ref[...], preferred_element_type=f32)
        + bemb_ref[...]
    )
    # SiLU; sigmoid in its tanh form so the transcendental sits on the EUP slot.
    z256 = z256 * (0.5 * (1.0 + jnp.tanh(0.5 * z256)))       # (TB, 256)

    # network: Linear(256->128) + ReLU
    h1 = jnp.dot(z256.astype(bf16), w1_ref[...], preferred_element_type=f32) + b1_ref[...]
    h1 = jnp.maximum(h1, 0.0)                                # (TB, 128)

    # Linear(128->256) + ReLU
    h2 = jnp.dot(h1.astype(bf16), w2_ref[...], preferred_element_type=f32) + b2_ref[...]
    h2 = jnp.maximum(h2, 0.0)                                # (TB, 256)

    # Linear(256->6), padded to 128 lanes for an unmasked store
    v = jnp.dot(h2.astype(bf16), w3_ref[...], preferred_element_type=f32) + b3_ref[...]
    out_ref[...] = (v * inv_std2).astype(out_ref.dtype)      # (TB, 128) bf16


def init_params(key):
    """Deterministic synthetic parameters matching the PyTorch module shapes."""
    ks = jax.random.split(key, 12)
    p = {}
    # GaussianFourierProjection.W : (enc_dim // 2,) scaled by 30
    p["w_gfp"] = (jax.random.normal(ks[0], (1, HALF_DIM)) * 30.0).astype(jnp.float32)
    # x_embed: Linear(12, 128)   (stored as weight^T: (in, out))
    p["wx"] = (jax.random.normal(ks[1], (INPUT_SIZE, ENC_DIM)) * 0.1).astype(jnp.float32)
    p["bx"] = (jax.random.normal(ks[2], (1, ENC_DIM)) * 0.1).astype(jnp.float32)
    # time_embed: Linear(128, 128)
    p["wt"] = (jax.random.normal(ks[3], (ENC_DIM, ENC_DIM)) * 0.1).astype(jnp.float32)
    p["bt"] = (jax.random.normal(ks[4], (1, ENC_DIM)) * 0.1).astype(jnp.float32)
    # network: Linear(256,128), Linear(128,256), Linear(256,6)
    p["w1"] = (jax.random.normal(ks[5], (FUSED_DIM, 128)) * 0.1).astype(jnp.float32)
    p["b1"] = (jax.random.normal(ks[6], (1, 128)) * 0.1).astype(jnp.float32)
    p["w2"] = (jax.random.normal(ks[7], (128, 256)) * 0.1).astype(jnp.float32)
    p["b2"] = (jax.random.normal(ks[8], (1, 256)) * 0.1).astype(jnp.float32)
    p["w3"] = (jax.random.normal(ks[9], (256, OUTPUT_SIZE)) * 0.1).astype(jnp.float32)
    p["b3"] = (jax.random.normal(ks[10], (1, OUTPUT_SIZE)) * 0.1).astype(jnp.float32)
    return p


def _pack_params(params):
    """Rearrange reference-layout params into the padded/fused/bf16 kernel layout."""
    f32, bf16 = jnp.float32, jnp.bfloat16
    wgfp2 = jnp.concatenate([params["w_gfp"], params["w_gfp"]], axis=-1).astype(f32)   # (1,128)
    phase = jnp.concatenate(
        [jnp.zeros((1, HALF_DIM), f32), jnp.full((1, HALF_DIM), 0.5 * math.pi, f32)],
        axis=-1)                                                                       # (1,128)
    wex = jnp.zeros((PACKED_IN, FUSED_DIM), f32).at[:INPUT_SIZE, :ENC_DIM].set(params["wx"])
    wet = jnp.zeros((ENC_DIM, FUSED_DIM), f32).at[:, ENC_DIM:].set(params["wt"])
    bemb = jnp.concatenate([params["bx"], params["bt"]], axis=-1).astype(f32)          # (1,256)
    w3p = jnp.zeros((FUSED_DIM, ENC_DIM), f32).at[:, :OUTPUT_SIZE].set(params["w3"])
    b3p = jnp.zeros((1, ENC_DIM), f32).at[:, :OUTPUT_SIZE].set(params["b3"])
    return (
        wgfp2, phase,
        wex.astype(bf16), wet.astype(bf16), bemb,
        params["w1"].astype(bf16), params["b1"].astype(f32),
        params["w2"].astype(bf16), params["b2"].astype(f32),
        w3p.astype(bf16), b3p,
    )


def naive_se3_diffusion_forward(x, R, k, params, *, block_b=1024):
    """x: (B,3), R: (B,3,3), k: (B,). Returns v / std^2 : (B, 6) float32."""
    B = x.shape[0]

    # Batch tile: multiple of 8 sublanes, large (default 1024) to amortize the
    # ~0.35 us per-grid-step overhead, capped at the padded batch.  For batches
    # big enough to split, also cap at ceil(B/2) so the "parallel" grid has >=2
    # steps and both v7x TensorCores get work (harmless on 1-TC v5e/v6e).
    tb = min(block_b, _round_up(B, 8))
    if B > 8:
        tb = min(tb, _round_up(pl.cdiv(B, 2), 8))
    b_pad = _round_up(B, tb)

    # Contiguous 16-lane f32 input rows: [x(3) | R(9) | k(1) | zero-pad(3)].
    # Padded batch rows get k=1 so 1/std^2 stays finite there.
    x_r = jnp.concatenate([x, R.reshape(B, -1)], axis=-1).astype(jnp.float32)  # (B,12)
    xrk = jnp.zeros((b_pad, PACKED_IN), jnp.float32)
    xrk = xrk.at[:, INPUT_SIZE].set(1.0)
    xrk = xrk.at[:B, :INPUT_SIZE].set(x_r)
    xrk = xrk.at[:B, INPUT_SIZE].set(k.astype(jnp.float32))

    packed = _pack_params(params)
    vmem = pltpu.MemorySpace.VMEM

    def w_spec(shape):
        return pl.BlockSpec(shape, lambda i: (0, 0), memory_space=vmem)

    out = pl.pallas_call(
        se3dif_kernel,
        out_shape=jax.ShapeDtypeStruct((b_pad, ENC_DIM), jnp.bfloat16),
        grid_spec=pltpu.PrefetchScalarGridSpec(
            num_scalar_prefetch=0,
            grid=(b_pad // tb,),
            in_specs=[
                pl.BlockSpec((tb, PACKED_IN), lambda i: (i, 0), memory_space=vmem),
                w_spec((1, ENC_DIM)),             # duplicated Fourier W
                w_spec((1, ENC_DIM)),             # phase row
                w_spec((PACKED_IN, FUSED_DIM)),   # fused x_embed weight (bf16)
                w_spec((ENC_DIM, FUSED_DIM)),     # fused time_embed weight (bf16)
                w_spec((1, FUSED_DIM)),           # [bx | bt]
                w_spec((FUSED_DIM, ENC_DIM)),     # network[0] weight^T (bf16)
                w_spec((1, ENC_DIM)),             # b1
                w_spec((ENC_DIM, FUSED_DIM)),     # network[2] weight^T (bf16)
                w_spec((1, FUSED_DIM)),           # b2
                w_spec((FUSED_DIM, ENC_DIM)),     # network[4] weight^T (bf16, lane padded)
                w_spec((1, ENC_DIM)),             # b3 (lane padded)
            ],
            out_specs=pl.BlockSpec((tb, ENC_DIM), lambda i: (i, 0), memory_space=vmem),
        ),
        compiler_params=pltpu.CompilerParams(
            dimension_semantics=("parallel",),     # shard batch over v7x's 2 TCs
            vmem_limit_bytes=32 * 1024 * 1024,
        ),
    )(xrk, *packed)

    return out[:B, :OUTPUT_SIZE].astype(jnp.float32)


def reference_forward(x, R, k, params):
    """Pure-JAX f32 reference mirroring the PyTorch forward exactly."""
    B = x.shape[0]
    x_r = jnp.concatenate([x, R.reshape(B, -1)], axis=-1)
    proj = k[:, None] * params["w_gfp"] * TWO_PI
    feat = jnp.concatenate([jnp.sin(proj), jnp.cos(proj)], axis=-1)
    z_time = feat @ params["wt"] + params["bt"]
    z_time = z_time * jax.nn.sigmoid(z_time)
    z = x_r @ params["wx"] + params["bx"]
    z = z * jax.nn.sigmoid(z)
    z_in = jnp.concatenate([z, z_time], axis=-1)
    h1 = jnp.maximum(z_in @ params["w1"] + params["b1"], 0.0)
    h2 = jnp.maximum(h1 @ params["w2"] + params["b2"], 0.0)
    v = h2 @ params["w3"] + params["b3"]
    std = jnp.sqrt((SIGMA ** (2.0 * k) - 1.0) / (2.0 * LOG_SIGMA))
    return v / (std[:, None] ** 2)


if __name__ == "__main__":
    key = jax.random.PRNGKey(0)
    k_param, k_x, k_R, k_t = jax.random.split(key, 4)

    B = 2
    params = init_params(k_param)
    x = jax.random.normal(k_x, (B, 3), dtype=jnp.float32)
    R = jax.random.normal(k_R, (B, 3, 3), dtype=jnp.float32)
    kk = jax.random.uniform(k_t, (B,), dtype=jnp.float32, minval=0.1, maxval=1.0)

    out = jax.block_until_ready(naive_se3_diffusion_forward(x, R, kk, params))
    ref = jax.block_until_ready(reference_forward(x, R, kk, params))

    assert out.shape == (B, OUTPUT_SIZE)
    # Tolerance reflects bf16 MXU operands + bf16 output store (per perf review);
    # accumulation, biases, activations and 1/std^2 remain f32.
    np.testing.assert_allclose(np.asarray(out), np.asarray(ref), rtol=2e-2, atol=2e-2)

    print("KERNEL_OK")
</pallas_src>

<mosaic_0001>
module attributes {stable_mosaic.version = 11 : i64} {
  func.func @se3dif_kernel(%arg0: i32, %arg1: memref<8x16xf32, #tpu.memory_space<vmem>>, %arg2: memref<1x128xf32, #tpu.memory_space<vmem>>, %arg3: memref<1x128xf32, #tpu.memory_space<vmem>>, %arg4: memref<16x256xbf16, #tpu.memory_space<vmem>>, %arg5: memref<128x256xbf16, #tpu.memory_space<vmem>>, %arg6: memref<1x256xf32, #tpu.memory_space<vmem>>, %arg7: memref<256x128xbf16, #tpu.memory_space<vmem>>, %arg8: memref<1x128xf32, #tpu.memory_space<vmem>>, %arg9: memref<128x256xbf16, #tpu.memory_space<vmem>>, %arg10: memref<1x256xf32, #tpu.memory_space<vmem>>, %arg11: memref<256x128xbf16, #tpu.memory_space<vmem>>, %arg12: memref<1x128xf32, #tpu.memory_space<vmem>>, %arg13: memref<8x128xbf16, #tpu.memory_space<vmem>>) attributes {dimension_semantics = [#tpu.dimension_semantics<parallel>], iteration_bounds = array<i64: 1>, scalar_prefetch = 0 : i64, scratch_operands = 0 : i64, tpu.core_type = #tpu.core_type<tc>, window_params = [{transform_indices = @transform_0, window_bounds = array<i64: 8, 16>}, {pipeline_mode = #tpu.pipeline_mode<synchronous>, transform_indices = @transform_1, window_bounds = array<i64: 1, 128>}, {pipeline_mode = #tpu.pipeline_mode<synchronous>, transform_indices = @transform_2, window_bounds = array<i64: 1, 128>}, {pipeline_mode = #tpu.pipeline_mode<synchronous>, transform_indices = @transform_3, window_bounds = array<i64: 16, 256>}, {pipeline_mode = #tpu.pipeline_mode<synchronous>, transform_indices = @transform_4, window_bounds = array<i64: 128, 256>}, {pipeline_mode = #tpu.pipeline_mode<synchronous>, transform_indices = @transform_5, window_bounds = array<i64: 1, 256>}, {pipeline_mode = #tpu.pipeline_mode<synchronous>, transform_indices = @transform_6, window_bounds = array<i64: 256, 128>}, {pipeline_mode = #tpu.pipeline_mode<synchronous>, transform_indices = @transform_7, window_bounds = array<i64: 1, 128>}, {pipeline_mode = #tpu.pipeline_mode<synchronous>, transform_indices = @transform_8, window_bounds = array<i64: 128, 256>}, {pipeline_mode = #tpu.pipeline_mode<synchronous>, transform_indices = @transform_9, window_bounds = array<i64: 1, 256>}, {pipeline_mode = #tpu.pipeline_mode<synchronous>, transform_indices = @transform_10, window_bounds = array<i64: 256, 128>}, {pipeline_mode = #tpu.pipeline_mode<synchronous>, transform_indices = @transform_11, window_bounds = array<i64: 1, 128>}, {transform_indices = @transform_12, window_bounds = array<i64: 8, 128>}]} {
    %c0 = arith.constant 0 : index
    %c0_0 = arith.constant 0 : index
    %0 = vector.load %arg1[%c0, %c0_0] : memref<8x16xf32, #tpu.memory_space<vmem>>, vector<8x16xf32>
    %1 = tpu.iota {dimensions = array<i32: 1>} : vector<8x16xi32>
    %c12_i32 = arith.constant 12 : i32
    %2 = vector.broadcast %c12_i32 : i32 to vector<8x16xi32>
    %3 = arith.cmpi eq, %1, %2 : vector<8x16xi32>
    %cst = arith.constant 0.000000e+00 : f32
    %4 = vector.broadcast %cst : f32 to vector<8x16xf32>
    %5 = arith.select %3, %0, %4 : vector<8x16xi1>, vector<8x16xf32>
    %cst_1 = arith.constant dense<0.000000e+00> : vector<8xf32>
    %6 = vector.multi_reduction <add>, %5, %cst_1 [1] : vector<8x16xf32> to vector<8xf32>
    %7 = vector.shape_cast %6 : vector<8xf32> to vector<8x1xf32>
    %cst_2 = arith.constant -1.38629436 : f32
    %8 = vector.broadcast %cst_2 : f32 to vector<8x1xf32>
    %9 = arith.mulf %8, %7 : vector<8x1xf32>
    %10 = math.exp %9 : vector<8x1xf32>
    %cst_3 = arith.constant 1.000000e+00 : f32
    %11 = vector.broadcast %cst_3 : f32 to vector<8x1xf32>
    %12 = arith.subf %10, %11 : vector<8x1xf32>
    %13 = tpu.reciprocal %12 {approx = true} : vector<8x1xf32> -> vector<8x1xf32>
    %cst_4 = arith.constant -1.38629436 : f32
    %14 = vector.broadcast %cst_4 : f32 to vector<8x1xf32>
    %15 = arith.mulf %14, %13 : vector<8x1xf32>
    %c0_5 = arith.constant 0 : index
    %c0_6 = arith.constant 0 : index
    %16 = vector.load %arg2[%c0_5, %c0_6] : memref<1x128xf32, #tpu.memory_space<vmem>>, vector<1x128xf32>
    %cst_7 = arith.constant 6.28318548 : f32
    %17 = vector.broadcast %cst_7 : f32 to vector<1x128xf32>
    %18 = arith.mulf %16, %17 : vector<1x128xf32>
    %19 = vector.broadcast %7 : vector<8x1xf32> to vector<8x128xf32>
    %20 = vector.broadcast %18 : vector<1x128xf32> to vector<8x128xf32>
    %21 = arith.mulf %19, %20 : vector<8x128xf32>
    %c0_8 = arith.constant 0 : index
    %c0_9 = arith.constant 0 : index
    %22 = vector.load %arg3[%c0_8, %c0_9] : memref<1x128xf32, #tpu.memory_space<vmem>>, vector<1x128xf32>
    %23 = vector.broadcast %22 : vector<1x128xf32> to vector<8x128xf32>
    %24 = arith.addf %21, %23 : vector<8x128xf32>
    %25 = math.sin %24 : vector<8x128xf32>
    %26 = arith.truncf %0 : vector<8x16xf32> to vector<8x16xbf16>
    %c0_10 = arith.constant 0 : index
    %c0_11 = arith.constant 0 : index
    %27 = vector.load %arg4[%c0_10, %c0_11] : memref<16x256xbf16, #tpu.memory_space<vmem>>, vector<16x256xbf16>
    %cst_12 = arith.constant dense<0.000000e+00> : vector<8x256xf32>
    %28 = tpu.matmul %26, %27, %cst_12 {dimension_numbers = #tpu.dot_dimension_numbers<[1], [0], [0], [1], [0, 0, 1, 1], [], []>} : vector<8x16xbf16>, vector<16x256xbf16>, vector<8x256xf32> -> vector<8x256xf32>
    %29 = arith.truncf %25 : vector<8x128xf32> to vector<8x128xbf16>
    %c0_13 = arith.constant 0 : index
    %c0_14 = arith.constant 0 : index
    %30 = vector.load %arg5[%c0_13, %c0_14] : memref<128x256xbf16, #tpu.memory_space<vmem>>, vector<128x256xbf16>
    %cst_15 = arith.constant dense<0.000000e+00> : vector<8x256xf32>
    %31 = tpu.matmul %29, %30, %cst_15 {dimension_numbers = #tpu.dot_dimension_numbers<[1], [0], [0], [1], [0, 0, 1, 1], [], []>} : vector<8x128xbf16>, vector<128x256xbf16>, vector<8x256xf32> -> vector<8x256xf32>
    %32 = arith.addf %28, %31 : vector<8x256xf32>
    %c0_16 = arith.constant 0 : index
    %c0_17 = arith.constant 0 : index
    %33 = vector.load %arg6[%c0_16, %c0_17] : memref<1x256xf32, #tpu.memory_space<vmem>>, vector<1x256xf32>
    %34 = vector.broadcast %33 : vector<1x256xf32> to vector<8x256xf32>
    %35 = arith.addf %32, %34 : vector<8x256xf32>
    %cst_18 = arith.constant 5.000000e-01 : f32
    %36 = vector.broadcast %cst_18 : f32 to vector<8x256xf32>
    %37 = arith.mulf %36, %35 : vector<8x256xf32>
    %38 = math.tanh %37 : vector<8x256xf32>
    %cst_19 = arith.constant 1.000000e+00 : f32
    %39 = vector.broadcast %cst_19 : f32 to vector<8x256xf32>
    %40 = arith.addf %39, %38 : vector<8x256xf32>
    %cst_20 = arith.constant 5.000000e-01 : f32
    %41 = vector.broadcast %cst_20 : f32 to vector<8x256xf32>
    %42 = arith.mulf %41, %40 : vector<8x256xf32>
    %43 = arith.mulf %35, %42 : vector<8x256xf32>
    %44 = arith.truncf %43 : vector<8x256xf32> to vector<8x256xbf16>
    %c0_21 = arith.constant 0 : index
    %c0_22 = arith.constant 0 : index
    %45 = vector.load %arg7[%c0_21, %c0_22] : memref<256x128xbf16, #tpu.memory_space<vmem>>, vector<256x128xbf16>
    %cst_23 = arith.constant dense<0.000000e+00> : vector<8x128xf32>
    %46 = tpu.matmul %44, %45, %cst_23 {dimension_numbers = #tpu.dot_dimension_numbers<[1], [0], [0], [1], [0, 0, 1, 1], [], []>} : vector<8x256xbf16>, vector<256x128xbf16>, vector<8x128xf32> -> vector<8x128xf32>
    %c0_24 = arith.constant 0 : index
    %c0_25 = arith.constant 0 : index
    %47 = vector.load %arg8[%c0_24, %c0_25] : memref<1x128xf32, #tpu.memory_space<vmem>>, vector<1x128xf32>
    %48 = vector.broadcast %47 : vector<1x128xf32> to vector<8x128xf32>
    %49 = arith.addf %46, %48 : vector<8x128xf32>
    %cst_26 = arith.constant 0.000000e+00 : f32
    %50 = vector.broadcast %cst_26 : f32 to vector<8x128xf32>
    %51 = arith.maximumf %49, %50 : vector<8x128xf32>
    %52 = arith.truncf %51 : vector<8x128xf32> to vector<8x128xbf16>
    %c0_27 = arith.constant 0 : index
    %c0_28 = arith.constant 0 : index
    %53 = vector.load %arg9[%c0_27, %c0_28] : memref<128x256xbf16, #tpu.memory_space<vmem>>, vector<128x256xbf16>
    %cst_29 = arith.constant dense<0.000000e+00> : vector<8x256xf32>
    %54 = tpu.matmul %52, %53, %cst_29 {dimension_numbers = #tpu.dot_dimension_numbers<[1], [0], [0], [1], [0, 0, 1, 1], [], []>} : vector<8x128xbf16>, vector<128x256xbf16>, vector<8x256xf32> -> vector<8x256xf32>
    %c0_30 = arith.constant 0 : index
    %c0_31 = arith.constant 0 : index
    %55 = vector.load %arg10[%c0_30, %c0_31] : memref<1x256xf32, #tpu.memory_space<vmem>>, vector<1x256xf32>
    %56 = vector.broadcast %55 : vector<1x256xf32> to vector<8x256xf32>
    %57 = arith.addf %54, %56 : vector<8x256xf32>
    %cst_32 = arith.constant 0.000000e+00 : f32
    %58 = vector.broadcast %cst_32 : f32 to vector<8x256xf32>
    %59 = arith.maximumf %57, %58 : vector<8x256xf32>
    %60 = arith.truncf %59 : vector<8x256xf32> to vector<8x256xbf16>
    %c0_33 = arith.constant 0 : index
    %c0_34 = arith.constant 0 : index
    %61 = vector.load %arg11[%c0_33, %c0_34] : memref<256x128xbf16, #tpu.memory_space<vmem>>, vector<256x128xbf16>
    %cst_35 = arith.constant dense<0.000000e+00> : vector<8x128xf32>
    %62 = tpu.matmul %60, %61, %cst_35 {dimension_numbers = #tpu.dot_dimension_numbers<[1], [0], [0], [1], [0, 0, 1, 1], [], []>} : vector<8x256xbf16>, vector<256x128xbf16>, vector<8x128xf32> -> vector<8x128xf32>
    %c0_36 = arith.constant 0 : index
    %c0_37 = arith.constant 0 : index
    %63 = vector.load %arg12[%c0_36, %c0_37] : memref<1x128xf32, #tpu.memory_space<vmem>>, vector<1x128xf32>
    %64 = vector.broadcast %63 : vector<1x128xf32> to vector<8x128xf32>
    %65 = arith.addf %62, %64 : vector<8x128xf32>
    %66 = vector.broadcast %15 : vector<8x1xf32> to vector<8x128xf32>
    %67 = arith.mulf %65, %66 : vector<8x128xf32>
    %68 = arith.truncf %67 : vector<8x128xf32> to vector<8x128xbf16>
    %c0_38 = arith.constant 0 : index
    %c0_39 = arith.constant 0 : index
    %69 = vector.load %arg13[%c0_38, %c0_39] : memref<8x128xbf16, #tpu.memory_space<vmem>>, vector<8x128xbf16>
    tpu.vector_store %arg13[%c0_38, %c0_39], %68 {strides = array<i32>} : memref<8x128xbf16, #tpu.memory_space<vmem>>, vector<8x128xbf16>,
    return
  }
  func.func @transform_0(%arg0: i32) -> (i32, i32) {
    %c0_i32 = arith.constant 0 : i32
    %c0_i32_0 = arith.constant 0 : i32
    return %arg0, %c0_i32 : i32, i32
  }
  func.func @transform_1(%arg0: i32) -> (i32, i32) {
    %c0_i32 = arith.constant 0 : i32
    %c0_i32_0 = arith.constant 0 : i32
    %c0_i32_1 = arith.constant 0 : i32
    return %c0_i32, %c0_i32_0 : i32, i32
  }
  func.func @transform_2(%arg0: i32) -> (i32, i32) {
    %c0_i32 = arith.constant 0 : i32
    %c0_i32_0 = arith.constant 0 : i32
    %c0_i32_1 = arith.constant 0 : i32
    return %c0_i32, %c0_i32_0 : i32, i32
  }
  func.func @transform_3(%arg0: i32) -> (i32, i32) {
    %c0_i32 = arith.constant 0 : i32
    %c0_i32_0 = arith.constant 0 : i32
    %c0_i32_1 = arith.constant 0 : i32
    return %c0_i32, %c0_i32_0 : i32, i32
  }
  func.func @transform_4(%arg0: i32) -> (i32, i32) {
    %c0_i32 = arith.constant 0 : i32
    %c0_i32_0 = arith.constant 0 : i32
    %c0_i32_1 = arith.constant 0 : i32
    return %c0_i32, %c0_i32_0 : i32, i32
  }
  func.func @transform_5(%arg0: i32) -> (i32, i32) {
    %c0_i32 = arith.constant 0 : i32
    %c0_i32_0 = arith.constant 0 : i32
    %c0_i32_1 = arith.constant 0 : i32
    return %c0_i32, %c0_i32_0 : i32, i32
  }
  func.func @transform_6(%arg0: i32) -> (i32, i32) {
    %c0_i32 = arith.constant 0 : i32
    %c0_i32_0 = arith.constant 0 : i32
    %c0_i32_1 = arith.constant 0 : i32
    return %c0_i32, %c0_i32_0 : i32, i32
  }
  func.func @transform_7(%arg0: i32) -> (i32, i32) {
    %c0_i32 = arith.constant 0 : i32
    %c0_i32_0 = arith.constant 0 : i32
    %c0_i32_1 = arith.constant 0 : i32
    return %c0_i32, %c0_i32_0 : i32, i32
  }
  func.func @transform_8(%arg0: i32) -> (i32, i32) {
    %c0_i32 = arith.constant 0 : i32
    %c0_i32_0 = arith.constant 0 : i32
    %c0_i32_1 = arith.constant 0 : i32
    return %c0_i32, %c0_i32_0 : i32, i32
  }
  func.func @transform_9(%arg0: i32) -> (i32, i32) {
    %c0_i32 = arith.constant 0 : i32
    %c0_i32_0 = arith.constant 0 : i32
    %c0_i32_1 = arith.constant 0 : i32
    return %c0_i32, %c0_i32_0 : i32, i32
  }
  func.func @transform_10(%arg0: i32) -> (i32, i32) {
    %c0_i32 = arith.constant 0 : i32
    %c0_i32_0 = arith.constant 0 : i32
    %c0_i32_1 = arith.constant 0 : i32
    return %c0_i32, %c0_i32_0 : i32, i32
  }
  func.func @transform_11(%arg0: i32) -> (i32, i32) {
    %c0_i32 = arith.constant 0 : i32
    %c0_i32_0 = arith.constant 0 : i32
    %c0_i32_1 = arith.constant 0 : i32
    return %c0_i32, %c0_i32_0 : i32, i32
  }
  func.func @transform_12(%arg0: i32) -> (i32, i32) {
    %c0_i32 = arith.constant 0 : i32
    %c0_i32_0 = arith.constant 0 : i32
    return %arg0, %c0_i32 : i32, i32
  }
}

</mosaic_0001>

<llo_original>
// kernel: tpu_custom_call.1
$region0: #{tpu_custom_call.1}
  #allocation0 [shape = 'u32[]', space=smem, size = 0x4, offset = 0x4, fixed_abs, tag = 'smem constant byte address 0x4 - core index']
  #allocation1 [shape = 'u32[144,128]{1,0:T(1,128)}', space=vmem, size = 0x12000, scoped, tag = 'internal scratch']
  %s0 = inlined_call_operand.hbm [shape: f32[8,16], index: 0, kind: input, shape index: {}]
  %s1 = inlined_call_operand.vmem [shape: f32[1,128], index: 1, kind: input, shape index: {}]
  %s2 = inlined_call_operand.vmem [shape: f32[1,128], index: 2, kind: input, shape index: {}]
  %s3 = inlined_call_operand.hbm [shape: bf16[16,256], index: 3, kind: input, shape index: {}]
  %s4 = inlined_call_operand.hbm [shape: bf16[128,256], index: 4, kind: input, shape index: {}]
  %s5 = inlined_call_operand.vmem [shape: f32[1,256], index: 5, kind: input, shape index: {}]
  %s6 = inlined_call_operand.hbm [shape: bf16[256,128], index: 6, kind: input, shape index: {}]
  %s7 = inlined_call_operand.vmem [shape: f32[1,128], index: 7, kind: input, shape index: {}]
  %s8 = inlined_call_operand.hbm [shape: bf16[128,256], index: 8, kind: input, shape index: {}]
  %s9 = inlined_call_operand.vmem [shape: f32[1,256], index: 9, kind: input, shape index: {}]
  %s10 = inlined_call_operand.hbm [shape: bf16[256,128], index: 10, kind: input, shape index: {}]
  %s11 = inlined_call_operand.vmem [shape: f32[1,128], index: 11, kind: input, shape index: {}]
  %s12 = inlined_call_operand.hbm [shape: bf16[8,128], index: 12, kind: output, shape index: {}]
  %s13 = sld [smem:[#allocation0]]
  $region82: #{tpu_custom_call.1} parent=0
    _
  %s15 = ssub.s32 1, %s13
  %s16 = scalar_select 0, %s15, %s13
  $region1: #{tpu_custom_call.1} parent=0
    #allocation2 [shape = 'u8[4096]{0}', space=vmem, size = 0x1000, scoped, tag = 'input window, operand 0, single buffered']
    #allocation3 [shape = 's32[1]{0}', space=sflag, size = 0x4, scoped, tag = 'scoped memory for tpu_custom_call.1']
    #allocation4 [shape = 's32[1]{0}', space=sflag, size = 0x4, scoped, tag = 'scoped memory for tpu_custom_call.1']
    #allocation5 [shape = 'u8[8192]{0}', space=vmem, size = 0x2000, scoped, tag = 'input window, operand 3, single buffered']
    #allocation6 [shape = 's32[1]{0}', space=sflag, size = 0x4, scoped, tag = 'scoped memory for tpu_custom_call.1']
    #allocation7 [shape = 'u8[65536]{0}', space=vmem, size = 0x10000, scoped, tag = 'input window, operand 4, single buffered']
    #allocation8 [shape = 'u8[65536]{0}', space=vmem, size = 0x10000, scoped, tag = 'input window, operand 6, single buffered']
    #allocation9 [shape = 's32[1]{0}', space=sflag, size = 0x4, scoped, tag = 'scoped memory for tpu_custom_call.1']
    #allocation10 [shape = 'u8[65536]{0}', space=vmem, size = 0x10000, scoped, tag = 'input window, operand 8, single buffered']
    #allocation11 [shape = 'u8[65536]{0}', space=vmem, size = 0x10000, scoped, tag = 'input window, operand 10, single buffered']
    #allocation12 [shape = 's32[1]{0}', space=sflag, size = 0x4, scoped, tag = 'scoped memory for tpu_custom_call.1']
    #allocation13 [shape = 'u8[2048]{0}', space=vmem, size = 0x800, scoped, tag = 'output window, operand 0, single buffered']
    %17 = vsyncpa [#allocation3], 0
    %18 = vsyncpa [#allocation6], 0
    %19 = vsyncpa [#allocation9], 0
    %20 = vsyncpa [#allocation12], 0
    %21 = vsyncpa [#allocation4], 0
    // Predicated region
    $region2: #{tpu_custom_call.1} parent=1 // pred_check
      _
    $region3: #{tpu_custom_call.1} parent=1 // pred_check_branch
      %23 = sbr.rel (0) target = $region5
    $region4: #{tpu_custom_call.1} parent=1 // pred_region
      %s25 = ssub.s32 128, 128
      %26 = vsyncadd [#allocation3], %s25
      %s28 = sshll.u32 [#allocation2], 4
      %s29 = int_to_ptr.vmem [resolvable:$true] %s28
      %31 = dma.hbm_to_vmem [thread:$0]  %s0, 128, %s29, [#allocation3]
    $region5: #{tpu_custom_call.1} parent=1 // pred_fallthru
      _
    // Predicated region
    $region6: #{tpu_custom_call.1} parent=1 // pred_check
      _
    $region7: #{tpu_custom_call.1} parent=1 // pred_check_branch
      %33 = sbr.rel (0) target = $region9
    $region8: #{tpu_custom_call.1} parent=1 // pred_region
      _
    $region9: #{tpu_custom_call.1} parent=1 // pred_fallthru
      _
    // Predicated region
    $region10: #{tpu_custom_call.1} parent=1 // pred_check
      _
    $region11: #{tpu_custom_call.1} parent=1 // pred_check_branch
      %35 = sbr.rel (0) target = $region13
    $region12: #{tpu_custom_call.1} parent=1 // pred_region
      _
    $region13: #{tpu_custom_call.1} parent=1 // pred_fallthru
      _
    // Predicated region
    $region14: #{tpu_custom_call.1} parent=1 // pred_check
      _
    $region15: #{tpu_custom_call.1} parent=1 // pred_check_branch
      %37 = sbr.rel (0) target = $region17
    $region16: #{tpu_custom_call.1} parent=1 // pred_region
      %s39 = ssub.s32 256, 256
      %40 = vsyncadd [#allocation6], %s39
      %s41 = sshll.u32 [#allocation5], 4
      %s42 = int_to_ptr.vmem [resolvable:$true] %s41
      %47 = dma.hbm_to_vmem [thread:$0]  %s3, 256, %s42, [#allocation6], 128, 128, 8
    $region17: #{tpu_custom_call.1} parent=1 // pred_fallthru
      _
    // Predicated region
    $region18: #{tpu_custom_call.1} parent=1 // pred_check
      _
    $region19: #{tpu_custom_call.1} parent=1 // pred_check_branch
      %49 = sbr.rel (0) target = $region21
    $region20: #{tpu_custom_call.1} parent=1 // pred_region
      %s51 = ssub.s32 2048, 2048
      %52 = vsyncadd [#allocation6], %s51
      %s53 = sshll.u32 [#allocation7], 4
      %s54 = int_to_ptr.vmem [resolvable:$true] %s53
      %59 = dma.hbm_to_vmem [thread:$0]  %s4, 2048, %s54, [#allocation6], 128, 128, 8
    $region21: #{tpu_custom_call.1} parent=1 // pred_fallthru
      _
    // Predicated region
    $region22: #{tpu_custom_call.1} parent=1 // pred_check
      _
    $region23: #{tpu_custom_call.1} parent=1 // pred_check_branch
      %61 = sbr.rel (0) target = $region25
    $region24: #{tpu_custom_call.1} parent=1 // pred_region
      _
    $region25: #{tpu_custom_call.1} parent=1 // pred_fallthru
      _
    // Predicated region
    $region26: #{tpu_custom_call.1} parent=1 // pred_check
      _
    $region27: #{tpu_custom_call.1} parent=1 // pred_check_branch
      %63 = sbr.rel (0) target = $region29
    $region28: #{tpu_custom_call.1} parent=1 // pred_region
      %s65 = ssub.s32 2048, 2048
      %66 = vsyncadd [#allocation9], %s65
      %s67 = sshll.u32 [#allocation8], 4
      %s68 = int_to_ptr.vmem [resolvable:$true] %s67
      %73 = dma.hbm_to_vmem [thread:$0]  %s6, 2048, %s68, [#allocation9], 64, 64, 4
    $region29: #{tpu_custom_call.1} parent=1 // pred_fallthru
      _
    // Predicated region
    $region30: #{tpu_custom_call.1} parent=1 // pred_check
      _
    $region31: #{tpu_custom_call.1} parent=1 // pred_check_branch
      %75 = sbr.rel (0) target = $region33
    $region32: #{tpu_custom_call.1} parent=1 // pred_region
      _
    $region33: #{tpu_custom_call.1} parent=1 // pred_fallthru
      _
    // Predicated region
    $region34: #{tpu_custom_call.1} parent=1 // pred_check
      _
    $region35: #{tpu_custom_call.1} parent=1 // pred_check_branch
      %77 = sbr.rel (0) target = $region37
    $region36: #{tpu_custom_call.1} parent=1 // pred_region
      %s79 = ssub.s32 2048, 2048
      %80 = vsyncadd [#allocation9], %s79
      %s81 = sshll.u32 [#allocation10], 4
      %s82 = int_to_ptr.vmem [resolvable:$true] %s81
      %87 = dma.hbm_to_vmem [thread:$0]  %s8, 2048, %s82, [#allocation9], 128, 128, 8
    $region37: #{tpu_custom_call.1} parent=1 // pred_fallthru
      _
    // Predicated region
    $region38: #{tpu_custom_call.1} parent=1 // pred_check
      _
    $region39: #{tpu_custom_call.1} parent=1 // pred_check_branch
      %89 = sbr.rel (0) target = $region41
    $region40: #{tpu_custom_call.1} parent=1 // pred_region
      _
    $region41: #{tpu_custom_call.1} parent=1 // pred_fallthru
      _
    // Predicated region
    $region42: #{tpu_custom_call.1} parent=1 // pred_check
      _
    $region43: #{tpu_custom_call.1} parent=1 // pred_check_branch
      %91 = sbr.rel (0) target = $region45
    $region44: #{tpu_custom_call.1} parent=1 // pred_region
      %s93 = ssub.s32 2048, 2048
      %94 = vsyncadd [#allocation12], %s93
      %s95 = sshll.u32 [#allocation11], 4
      %s96 = int_to_ptr.vmem [resolvable:$true] %s95
      %101 = dma.hbm_to_vmem [thread:$0]  %s10, 2048, %s96, [#allocation12], 64, 64, 4
    $region45: #{tpu_custom_call.1} parent=1 // pred_fallthru
      _
    // Predicated region
    $region46: #{tpu_custom_call.1} parent=1 // pred_check
      _
    $region47: #{tpu_custom_call.1} parent=1 // pred_check_branch
      %103 = sbr.rel (0) target = $region49
    $region48: #{tpu_custom_call.1} parent=1 // pred_region
      _
    $region49: #{tpu_custom_call.1} parent=1 // pred_fallthru
      _
    // Predicated region
    $region50: #{tpu_custom_call.1} parent=1 // pred_check
      _
    $region51: #{tpu_custom_call.1} parent=1 // pred_check_branch
      %105 = sbr.rel (0) target = $region53
    $region52: #{tpu_custom_call.1} parent=1 // pred_region
      %106 = dma.done [#allocation3], 128
    $region53: #{tpu_custom_call.1} parent=1 // pred_fallthru
      _
    // Predicated region
    $region54: #{tpu_custom_call.1} parent=1 // pred_check
      _
    $region55: #{tpu_custom_call.1} parent=1 // pred_check_branch
      %108 = sbr.rel (0) target = $region57
    $region56: #{tpu_custom_call.1} parent=1 // pred_region
      %109 = dma.done [#allocation6], 256
    $region57: #{tpu_custom_call.1} parent=1 // pred_fallthru
      _
    // Predicated region
    $region58: #{tpu_custom_call.1} parent=1 // pred_check
      _
    $region59: #{tpu_custom_call.1} parent=1 // pred_check_branch
      %111 = sbr.rel (0) target = $region61
    $region60: #{tpu_custom_call.1} parent=1 // pred_region
      %112 = dma.done [#allocation6], 2048
    $region61: #{tpu_custom_call.1} parent=1 // pred_fallthru
      _
    // Predicated region
    $region62: #{tpu_custom_call.1} parent=1 // pred_check
      _
    $region63: #{tpu_custom_call.1} parent=1 // pred_check_branch
      %114 = sbr.rel (0) target = $region65
    $region64: #{tpu_custom_call.1} parent=1 // pred_region
      %115 = dma.done [#allocation9], 2048
    $region65: #{tpu_custom_call.1} parent=1 // pred_fallthru
      _
    // Predicated region
    $region66: #{tpu_custom_call.1} parent=1 // pred_check
      _
    $region67: #{tpu_custom_call.1} parent=1 // pred_check_branch
      %117 = sbr.rel (0) target = $region69
    $region68: #{tpu_custom_call.1} parent=1 // pred_region
      %118 = dma.done [#allocation9], 2048
    $region69: #{tpu_custom_call.1} parent=1 // pred_fallthru
      _
    // Predicated region
    $region70: #{tpu_custom_call.1} parent=1 // pred_check
      _
    $region71: #{tpu_custom_call.1} parent=1 // pred_check_branch
      %120 = sbr.rel (0) target = $region73
    $region72: #{tpu_custom_call.1} parent=1 // pred_region
      %121 = dma.done [#allocation12], 2048
    $region73: #{tpu_custom_call.1} parent=1 // pred_fallthru
      _
    %v123 = vld [vmem:[#allocation2] sm:$0xff]
    %v124 = vlaneseq
    %v125 = vand.u32 %v124, 127
    %vm126 = vcmp.eq.s32.totalorder %v125, 12
    %v127 = vsel %vm126, %v123, 0.0
    %vm128 = vcmask 130048
    %v129 = vsel %vm128, %v127, 0.0
    %130 = vadd.xlane.f32.xlu0 %v129
    %v131 = vpop.xlane.xlu0 %130
    %v132 = vmul.f32 %v131, -1.3862944
    %v133 = vmul.f32 %v132, 1.442695
    %v134 = vpow.pop %v133
    %v135 = vsub.f32 %v134, 1.0
    %v136 = vrcp.pop %v135
    %v137 = vmul.f32 %v136, -1.3862944
    %v138 = vld [vmem:[%s1] sm:$0x1]
    %v139 = vmul.f32 %v138, 6.2831855
    %v141 = vlaneseq
    %v142 = vshrl.u32 %v141, 7
    %v143 = vsub.s32 0, %v142
    %v144 = vrot.slane %v139, %v143
    %v146 = vmul.f32 %v131, %v144
    %v147 = vld [vmem:[%s2] sm:$0x1]
    %v149 = vlaneseq
    %v150 = vshrl.u32 %v149, 7
    %v151 = vsub.s32 0, %v150
    %v152 = vrot.slane %v147, %v151
    %v154 = vadd.f32 %v146, %v152
    %v155 = vand.u32 2147483647, %v154
    %vm156 = vcmp.le.f32.partialorder %v155, 0.7853982
    %vm157 = vcmp.lt.s32.totalorder %v154, 0
    %v158 = vand.u32 %v154, 2139095040
    %v159 = vshrl.u32 %v158, 23
    %v160 = vsub.s32 %v159, 127
    %v161 = vand.u32 2147483647, %v154
    %v162 = vand.u32 %v161, 8388607
    %v163 = vor.u32 %v162, 8388608
    %v164 = vsub.s32 0, %v163
    %v165 = vadd.s32 %v160, 1
    %vm166 = vcmp.gt.s32.totalorder %v165, 0
    %v167 = vsel %vm166, %v165, 0
    %v168 = vshrl.u32 %v167, 5
    %v169 = vand.u32 %v167, 31
    %v170 = vsub.s32 32, %v169
    %v171 = vshrl.u32 683565275, %v170
    %v172 = vshll.u32 683565275, %v169
    %v173 = vshrl.u32 2475754826, %v170
    %v174 = vor.u32 %v172, %v173
    %v175 = vshll.u32 2475754826, %v169
    %v176 = vshrl.u32 2131351028, %v170
    %v177 = vor.u32 %v175, %v176
    %v178 = vshll.u32 2131351028, %v169
    %v179 = vshrl.u32 2102212464, %v170
    %v180 = vor.u32 %v178, %v179
    %v181 = vshll.u32 2102212464, %v169
    %v182 = vshrl.u32 920167782, %v170
    %v183 = vor.u32 %v181, %v182
    %v184 = vshll.u32 920167782, %v169
    %v185 = vshrl.u32 1326507024, %v170
    %v186 = vor.u32 %v184, %v185
    %vm187 = vcmp.lt.s32.totalorder %v168, 1
    %vm188 = vcmp.lt.s32.totalorder %v168, 2
    %vm189 = vcmp.lt.s32.totalorder %v168, 3
    %vm190 = vcmp.lt.s32.totalorder %v168, 4
    %v191 = vsel %vm187, %v171, %v174
    %v192 = vsel %vm190, %v180, 2102212464
    %v193 = vsel %vm189, %v177, %v192
    %v194 = vsel %vm188, %v191, %v193
    %v195 = vsel %vm187, %v174, %v177
    %v196 = vsel %vm190, %v183, 920167782
    %v197 = vsel %vm189, %v180, %v196
    %v198 = vsel %vm188, %v195, %v197
    %v199 = vsel %vm187, %v177, %v180
    %v200 = vsel %vm190, %v186, 1326507024
    %v201 = vsel %vm189, %v183, %v200
    %v202 = vsel %vm188, %v199, %v201
    %v203 = vshll.u32 %v163, 8
    %v204 = vmul.u32.u64.compose %v203, %v202
    %v205 = vextract.low.u32 %v204
    %v206 = vextract.high.u32 %v204
    %v207 = vmul.u32.u64.compose %v203, %v198
    %v208 = vextract.low.u32 %v207
    %v209 = vextract.high.u32 %v207
    %v210 = vmul.u32 %v203, %v194
    %v211 = vadd.s32 %v206, %v208
    %vm212 = vc.u32 %v206, %v208
    %v213 = vadd.s32 %v209, 1
    %v214 = vsel %vm212, %v213, %v209
    %v215 = vadd.s32 %v210, %v214
    %v216 = vadd.s32 %v215, 536870912
    %v217 = vshrl.u32 %v216, 30
    %v218 = vshll.u32 %v217, 30
    %v219 = vsub.s32 %v215, %v218
    %vm220 = vcmp.lt.s32.totalorder %v219, 0
    %v221 = vsub.s32 0, %v219
    %v222 = vsel %vm220, %v221, %v219
    %v223 = vclz %v222
    %v224 = vsub.s32 %v223, 2
    %vm225 = vcmp.gt.s32.totalorder 0, %v224
    %v226 = vsel %vm225, 0, %v224
    %v227 = vsub.s32 32, %v226
    %v228 = vshll.u32 %v219, %v226
    %v229 = vshrl.u32 %v211, %v227
    %v230 = vor.u32 %v228, %v229
    %v231 = vsub.s32 4294967266, %v226
    %v232 = vadd.s32 %v231, 127
    %v233 = vshll.u32 %v232, 23
    %v234 = vor.u32 4788187, %v233
    %v235 = vand.u32 2147483647, %v234
    %v237 = vcvt.s32.f32 %v230
    %v238 = vmul.f32 %v237, %v235
    %v239 = vxor.u32 %v238, 2147483648
    %v240 = vsel %vm157, %v239, %v238
    %v241 = vsub.s32 4, %v217
    %v242 = vsel %vm157, %v241, %v217
    %v243 = vsel %vm156, %v154, %v240
    %v244 = vsel %vm156, 0, %v242
    %v245 = vcosq.f32.pop %v243
    %v246 = vsinq.f32.pop %v243
    %vm247 = vweird.f32 %v154
    %v248 = vadd.s32 %v244, 3
    %v249 = vand.u32 %v248, 3
    %vm250 = vcmp.lt.s32.totalorder %v249, 2
    %vm251 = vcmp.eq.s32.totalorder %v249, 0
    %v252 = vxor.u32 %v246, 2147483648
    %v253 = vsel %vm251, %v245, %v252
    %vm254 = vcmp.eq.s32.totalorder %v249, 2
    %v255 = vxor.u32 %v245, 2147483648
    %v256 = vsel %vm254, %v255, %v246
    %v257 = vsel %vm250, %v253, %v256
    %v258 = vsel %vm247, nan, %v257
    %v259 = vpack.c.bf16 %v123, %v123
    %v260 = vld [vmem:[#allocation5] sm:$0xff]
    %v261 = vld [vmem:[#allocation5 + $0x8] sm:$0xff]
    %v262 = vpack.c.bf16 %v258, %v258
    %v263 = vld [vmem:[#allocation7] sm:$0xff]
    %v264 = vld [vmem:[#allocation7 + $0x8] sm:$0xff]
    %v265 = vld [vmem:[#allocation7 + $0x10] sm:$0xff]
    %v266 = vld [vmem:[#allocation7 + $0x18] sm:$0xff]
    %v267 = vld [vmem:[#allocation7 + $0x20] sm:$0xff]
    %v268 = vld [vmem:[#allocation7 + $0x28] sm:$0xff]
    %v269 = vld [vmem:[#allocation7 + $0x30] sm:$0xff]
    %v270 = vld [vmem:[#allocation7 + $0x38] sm:$0xff]
    %v271 = vld [vmem:[#allocation7 + $0x40] sm:$0xff]
    %v272 = vld [vmem:[#allocation7 + $0x48] sm:$0xff]
    %v273 = vld [vmem:[#allocation7 + $0x50] sm:$0xff]
    %v274 = vld [vmem:[#allocation7 + $0x58] sm:$0xff]
    %v275 = vld [vmem:[#allocation7 + $0x60] sm:$0xff]
    %v276 = vld [vmem:[#allocation7 + $0x68] sm:$0xff]
    %v277 = vld [vmem:[#allocation7 + $0x70] sm:$0xff]
    %v278 = vld [vmem:[#allocation7 + $0x78] sm:$0xff]
    %v295 = vunpack.c.l.b16 %v263
    %v296 = vunpack.c.h.b16 %v263
    %v297 = vunpack.c.l.b16 %v264
    %v298 = vunpack.c.h.b16 %v264
    %v299 = vunpack.c.l.b16 %v265
    %v300 = vunpack.c.h.b16 %v265
    %v301 = vunpack.c.l.b16 %v266
    %v302 = vunpack.c.h.b16 %v266
    %v303 = vunpack.c.l.b16 %v267
    %v304 = vunpack.c.h.b16 %v267
    %v305 = vunpack.c.l.b16 %v268
    %v306 = vunpack.c.h.b16 %v268
    %v307 = vunpack.c.l.b16 %v269
    %v308 = vunpack.c.h.b16 %v269
    %v309 = vunpack.c.l.b16 %v270
    %v310 = vunpack.c.h.b16 %v270
    %v311 = vunpack.c.l.b16 %v271
    %v312 = vunpack.c.h.b16 %v271
    %v313 = vunpack.c.l.b16 %v272
    %v314 = vunpack.c.h.b16 %v272
    %v315 = vunpack.c.l.b16 %v273
    %v316 = vunpack.c.h.b16 %v273
    %v317 = vunpack.c.l.b16 %v274
    %v318 = vunpack.c.h.b16 %v274
    %v319 = vunpack.c.l.b16 %v275
    %v320 = vunpack.c.h.b16 %v275
    %v321 = vunpack.c.l.b16 %v276
    %v322 = vunpack.c.h.b16 %v276
    %v323 = vunpack.c.l.b16 %v277
    %v324 = vunpack.c.h.b16 %v277
    %v325 = vunpack.c.l.b16 %v278
    %v326 = vunpack.c.h.b16 %v278
    %v327 = vpack.c.b16 %v297, %v295
    %v328 = vpack.c.b16 %v298, %v296
    %v329 = vpack.c.b16 %v301, %v299
    %v330 = vpack.c.b16 %v302, %v300
    %v331 = vpack.c.b16 %v305, %v303
    %v332 = vpack.c.b16 %v306, %v304
    %v333 = vpack.c.b16 %v309, %v307
    %v334 = vpack.c.b16 %v310, %v308
    %v335 = vpack.c.b16 %v313, %v311
    %v336 = vpack.c.b16 %v314, %v312
    %v337 = vpack.c.b16 %v317, %v315
    %v338 = vpack.c.b16 %v318, %v316
    %v339 = vpack.c.b16 %v321, %v319
    %v340 = vpack.c.b16 %v322, %v320
    %v341 = vpack.c.b16 %v325, %v323
    %v342 = vpack.c.b16 %v326, %v324
    %359 = vmatprep.subr.bf16.mxu0 %v328
    %360 = vmatpush1.bf16.msra.mxu0 %v327
    %361 = vmatprep.subr.bf16.mxu0 %v330
    %362 = vmatpush1.bf16.msra.mxu0 %v329
    %363 = vmatprep.subr.bf16.mxu0 %v332
    %364 = vmatpush1.bf16.msra.mxu0 %v331
    %365 = vmatprep.subr.bf16.mxu0 %v334
    %366 = vmatpush1.bf16.msra.mxu0 %v333
    %367 = vmatprep.subr.bf16.mxu0 %v336
    %368 = vmatpush1.bf16.msra.mxu0 %v335
    %369 = vmatprep.subr.bf16.mxu0 %v338
    %370 = vmatpush1.bf16.msra.mxu0 %v337
    %371 = vmatprep.subr.bf16.mxu0 %v340
    %372 = vmatpush1.bf16.msra.mxu0 %v339
    %373 = vmatprep.subr.bf16.mxu0 %v342
    %374 = vmatpush1.bf16.msra.mxu0 %v341
    %375 = vmatprep.subr.bf16.mxu0 0
    %376 = vmatpush1.bf16.msra.mxu0 0
    %377 = vmatprep.subr.bf16.mxu0 0
    %378 = vmatpush1.bf16.msra.mxu0 0
    %379 = vmatprep.subr.bf16.mxu0 0
    %380 = vmatpush1.bf16.msra.mxu0 0
    %381 = vmatprep.subr.bf16.mxu0 0
    %382 = vmatpush1.bf16.msra.mxu0 0
    %383 = vmatprep.subr.bf16.mxu0 0
    %384 = vmatpush1.bf16.msra.mxu0 0
    %385 = vmatprep.subr.bf16.mxu0 0
    %386 = vmatpush1.bf16.msra.mxu0 0
    %387 = vmatprep.subr.bf16.mxu0 0
    %388 = vmatpush1.bf16.msra.mxu0 0
    %389 = vmatprep.subr.bf16.mxu0 0
    %390 = vmatpush1.bf16.msra.mxu0 0
    %391 = vmatprep.mubr.bf16.mxu0 0
    %392 = vmatmul.mubr.bf16.gmra.mrb[0].mxu0 %v262
    %v393 = vpop.f32.mrb[0].mxu0
    %v394 = vadd.f32 0.0, %v393
    %v395 = vpop.f32.mrb[0].mxu0
    %v396 = vadd.f32 0.0, %v395
    %v397 = vpop.f32.mrb[0].mxu0
    %v398 = vpop.f32.mrb[0].mxu0
    %399 = vdwg.mxu0
    %v402 = vunpack.c.l.b16 %v260
    %v403 = vunpack.c.h.b16 %v260
    %v404 = vunpack.c.l.b16 %v261
    %v405 = vunpack.c.h.b16 %v261
    %v406 = vpack.c.b16 %v404, %v402
    %v407 = vpack.c.b16 %v405, %v403
    %v411 = vsel %vm128, %v259, 0
    %413 = vmatprep.subr.bf16.mxu0 %v407
    %414 = vmatpush1.bf16.msra.mxu0 %v406
    %415 = vmatprep.subr.bf16.mxu0 0
    %416 = vmatpush1.bf16.msra.mxu0 0
    %417 = vmatprep.subr.bf16.mxu0 0
    %418 = vmatpush1.bf16.msra.mxu0 0
    %419 = vmatprep.subr.bf16.mxu0 0
    %420 = vmatpush1.bf16.msra.mxu0 0
    %421 = vmatprep.subr.bf16.mxu0 0
    %422 = vmatpush1.bf16.msra.mxu0 0
    %423 = vmatprep.subr.bf16.mxu0 0
    %424 = vmatpush1.bf16.msra.mxu0 0
    %425 = vmatprep.subr.bf16.mxu0 0
    %426 = vmatpush1.bf16.msra.mxu0 0
    %427 = vmatprep.subr.bf16.mxu0 0
    %428 = vmatpush1.bf16.msra.mxu0 0
    %429 = vmatprep.subr.bf16.mxu0 0
    %430 = vmatpush1.bf16.msra.mxu0 0
    %431 = vmatprep.subr.bf16.mxu0 0
    %432 = vmatpush1.bf16.msra.mxu0 0
    %433 = vmatprep.subr.bf16.mxu0 0
    %434 = vmatpush1.bf16.msra.mxu0 0
    %435 = vmatprep.subr.bf16.mxu0 0
    %436 = vmatpush1.bf16.msra.mxu0 0
    %437 = vmatprep.subr.bf16.mxu0 0
    %438 = vmatpush1.bf16.msra.mxu0 0
    %439 = vmatprep.subr.bf16.mxu0 0
    %440 = vmatpush1.bf16.msra.mxu0 0
    %441 = vmatprep.subr.bf16.mxu0 0
    %442 = vmatpush1.bf16.msra.mxu0 0
    %443 = vmatprep.subr.bf16.mxu0 0
    %444 = vmatpush1.bf16.msra.mxu0 0
    %445 = vmatprep.mubr.bf16.mxu0 0
    %446 = vmatmul.mubr.bf16.gmra.mrb[0].mxu0 %v411
    %v447 = vpop.f32.mrb[0].mxu0
    %v448 = vadd.f32 %v394, %v447
    %v449 = vpop.f32.mrb[0].mxu0
    %v450 = vadd.f32 %v396, %v449
    %v451 = vpop.f32.mrb[0].mxu0
    %v452 = vpop.f32.mrb[0].mxu0
    %453 = vdwg.mxu0
    %v454 = vld [vmem:[%s5] sm:$0x3]
    %v456 = vlaneseq
    %v457 = vshrl.u32 %v456, 7
    %v458 = vsub.s32 0, %v457
    %v459 = vrot.slane %v454, %v458
    %v460 = vlaneseq
    %v461 = vshrl.u32 %v460, 7
    %v462 = vsub.s32 1, %v461
    %v463 = vrot.slane %v454, %v462
    %v466 = vadd.f32 %v448, %v459
    %v467 = vadd.f32 %v450, %v463
    %v468 = vmul.f32 %v466, 0.5
    %v469 = vmul.f32 %v467, 0.5
    %v470 = vtanh.pop %v468
    %v471 = vtanh.pop %v469
    %v472 = vadd.f32 %v470, 1.0
    %v473 = vadd.f32 %v471, 1.0
    %v474 = vmul.f32 %v472, 0.5
    %v475 = vmul.f32 %v473, 0.5
    %v476 = vmul.f32 %v466, %v474
    %v477 = vmul.f32 %v467, %v475
    %v478 = vpack.c.bf16 %v476, %v476
    %v479 = vpack.c.bf16 %v477, %v477
    %v480 = vld [vmem:[#allocation8] sm:$0xf]
    %v481 = vld [vmem:[#allocation8 + $0x4] sm:$0xf]
    %v482 = vld [vmem:[#allocation8 + $0x8] sm:$0xf]
    %v483 = vld [vmem:[#allocation8 + $0xc] sm:$0xf]
    %v484 = vld [vmem:[#allocation8 + $0x10] sm:$0xf]
    %v485 = vld [vmem:[#allocation8 + $0x14] sm:$0xf]
    %v486 = vld [vmem:[#allocation8 + $0x18] sm:$0xf]
    %v487 = vld [vmem:[#allocation8 + $0x1c] sm:$0xf]
    %v488 = vld [vmem:[#allocation8 + $0x20] sm:$0xf]
    %v489 = vld [vmem:[#allocation8 + $0x24] sm:$0xf]
    %v490 = vld [vmem:[#allocation8 + $0x28] sm:$0xf]
    %v491 = vld [vmem:[#allocation8 + $0x2c] sm:$0xf]
    %v492 = vld [vmem:[#allocation8 + $0x30] sm:$0xf]
    %v493 = vld [vmem:[#allocation8 + $0x34] sm:$0xf]
    %v494 = vld [vmem:[#allocation8 + $0x38] sm:$0xf]
    %v495 = vld [vmem:[#allocation8 + $0x3c] sm:$0xf]
    %v496 = vld [vmem:[#allocation8 + $0x40] sm:$0xf]
    %v497 = vld [vmem:[#allocation8 + $0x44] sm:$0xf]
    %v498 = vld [vmem:[#allocation8 + $0x48] sm:$0xf]
    %v499 = vld [vmem:[#allocation8 + $0x4c] sm:$0xf]
    %v500 = vld [vmem:[#allocation8 + $0x50] sm:$0xf]
    %v501 = vld [vmem:[#allocation8 + $0x54] sm:$0xf]
    %v502 = vld [vmem:[#allocation8 + $0x58] sm:$0xf]
    %v503 = vld [vmem:[#allocation8 + $0x5c] sm:$0xf]
    %v504 = vld [vmem:[#allocation8 + $0x60] sm:$0xf]
    %v505 = vld [vmem:[#allocation8 + $0x64] sm:$0xf]
    %v506 = vld [vmem:[#allocation8 + $0x68] sm:$0xf]
    %v507 = vld [vmem:[#allocation8 + $0x6c] sm:$0xf]
    %v508 = vld [vmem:[#allocation8 + $0x70] sm:$0xf]
    %v509 = vld [vmem:[#allocation8 + $0x74] sm:$0xf]
    %v510 = vld [vmem:[#allocation8 + $0x78] sm:$0xf]
    %v511 = vld [vmem:[#allocation8 + $0x7c] sm:$0xf]
    %v512 = vld [vmem:[%s7] sm:$0x1]
    %v514 = vlaneseq
    %v515 = vshrl.u32 %v514, 7
    %v516 = vsub.s32 0, %v515
    %v517 = vrot.slane %v512, %v516
    %v551 = vunpack.c.l.b16 %v480
    %v552 = vunpack.c.l.b16 %v481
    %v553 = vunpack.c.l.b16 %v482
    %v554 = vunpack.c.l.b16 %v483
    %v555 = vunpack.c.l.b16 %v484
    %v556 = vunpack.c.l.b16 %v485
    %v557 = vunpack.c.l.b16 %v486
    %v558 = vunpack.c.l.b16 %v487
    %v559 = vunpack.c.l.b16 %v488
    %v560 = vunpack.c.l.b16 %v489
    %v561 = vunpack.c.l.b16 %v490
    %v562 = vunpack.c.l.b16 %v491
    %v563 = vunpack.c.l.b16 %v492
    %v564 = vunpack.c.l.b16 %v493
    %v565 = vunpack.c.l.b16 %v494
    %v566 = vunpack.c.l.b16 %v495
    %v567 = vunpack.c.l.b16 %v496
    %v568 = vunpack.c.l.b16 %v497
    %v569 = vunpack.c.l.b16 %v498
    %v570 = vunpack.c.l.b16 %v499
    %v571 = vunpack.c.l.b16 %v500
    %v572 = vunpack.c.l.b16 %v501
    %v573 = vunpack.c.l.b16 %v502
    %v574 = vunpack.c.l.b16 %v503
    %v575 = vunpack.c.l.b16 %v504
    %v576 = vunpack.c.l.b16 %v505
    %v577 = vunpack.c.l.b16 %v506
    %v578 = vunpack.c.l.b16 %v507
    %v579 = vunpack.c.l.b16 %v508
    %v580 = vunpack.c.l.b16 %v509
    %v581 = vunpack.c.l.b16 %v510
    %v582 = vunpack.c.l.b16 %v511
    %v583 = vpack.c.b16 %v552, %v551
    %v584 = vpack.c.b16 %v554, %v553
    %v585 = vpack.c.b16 %v556, %v555
    %v586 = vpack.c.b16 %v558, %v557
    %v587 = vpack.c.b16 %v560, %v559
    %v588 = vpack.c.b16 %v562, %v561
    %v589 = vpack.c.b16 %v564, %v563
    %v590 = vpack.c.b16 %v566, %v565
    %v591 = vpack.c.b16 %v568, %v567
    %v592 = vpack.c.b16 %v570, %v569
    %v593 = vpack.c.b16 %v572, %v571
    %v594 = vpack.c.b16 %v574, %v573
    %v595 = vpack.c.b16 %v576, %v575
    %v596 = vpack.c.b16 %v578, %v577
    %v597 = vpack.c.b16 %v580, %v579
    %v598 = vpack.c.b16 %v582, %v581
    %615 = vmatprep.subr.bf16.mxu0 0
    %616 = vmatpush1.bf16.msra.mxu0 %v583
    %617 = vmatprep.subr.bf16.mxu0 0
    %618 = vmatpush1.bf16.msra.mxu0 %v584
    %619 = vmatprep.subr.bf16.mxu0 0
    %620 = vmatpush1.bf16.msra.mxu0 %v585
    %621 = vmatprep.subr.bf16.mxu0 0
    %622 = vmatpush1.bf16.msra.mxu0 %v586
    %623 = vmatprep.subr.bf16.mxu0 0
    %624 = vmatpush1.bf16.msra.mxu0 %v587
    %625 = vmatprep.subr.bf16.mxu0 0
    %626 = vmatpush1.bf16.msra.mxu0 %v588
    %627 = vmatprep.subr.bf16.mxu0 0
    %628 = vmatpush1.bf16.msra.mxu0 %v589
    %629 = vmatprep.subr.bf16.mxu0 0
    %630 = vmatpush1.bf16.msra.mxu0 %v590
    %631 = vmatprep.subr.bf16.mxu0 0
    %632 = vmatpush1.bf16.msra.mxu0 %v591
    %633 = vmatprep.subr.bf16.mxu0 0
    %634 = vmatpush1.bf16.msra.mxu0 %v592
    %635 = vmatprep.subr.bf16.mxu0 0
    %636 = vmatpush1.bf16.msra.mxu0 %v593
    %637 = vmatprep.subr.bf16.mxu0 0
    %638 = vmatpush1.bf16.msra.mxu0 %v594
    %639 = vmatprep.subr.bf16.mxu0 0
    %640 = vmatpush1.bf16.msra.mxu0 %v595
    %641 = vmatprep.subr.bf16.mxu0 0
    %642 = vmatpush1.bf16.msra.mxu0 %v596
    %643 = vmatprep.subr.bf16.mxu0 0
    %644 = vmatpush1.bf16.msra.mxu0 %v597
    %645 = vmatprep.subr.bf16.mxu0 0
    %646 = vmatpush1.bf16.msra.mxu0 %v598
    %647 = vmatprep.mubr.bf16.mxu0 %v479
    %648 = vmatmul.mubr.bf16.gmra.mrb[0].mxu0 %v478
    %v649 = vpop.f32.mrb[0].mxu0
    %v650 = vadd.f32 %v517, %v649
    %v651 = vpop.f32.mrb[0].mxu0
    %v652 = vpop.f32.mrb[0].mxu0
    %v653 = vpop.f32.mrb[0].mxu0
    %654 = vdwg.mxu0
    %v655 = vmax.f32 %v650, 0.0
    %v656 = vpack.c.bf16 %v655, %v655
    %v657 = vld [vmem:[#allocation10] sm:$0xff]
    %v658 = vld [vmem:[#allocation10 + $0x8] sm:$0xff]
    %v659 = vld [vmem:[#allocation10 + $0x10] sm:$0xff]
    %v660 = vld [vmem:[#allocation10 + $0x18] sm:$0xff]
    %v661 = vld [vmem:[#allocation10 + $0x20] sm:$0xff]
    %v662 = vld [vmem:[#allocation10 + $0x28] sm:$0xff]
    %v663 = vld [vmem:[#allocation10 + $0x30] sm:$0xff]
    %v664 = vld [vmem:[#allocation10 + $0x38] sm:$0xff]
    %v665 = vld [vmem:[#allocation10 + $0x40] sm:$0xff]
    %v666 = vld [vmem:[#allocation10 + $0x48] sm:$0xff]
    %v667 = vld [vmem:[#allocation10 + $0x50] sm:$0xff]
    %v668 = vld [vmem:[#allocation10 + $0x58] sm:$0xff]
    %v669 = vld [vmem:[#allocation10 + $0x60] sm:$0xff]
    %v670 = vld [vmem:[#allocation10 + $0x68] sm:$0xff]
    %v671 = vld [vmem:[#allocation10 + $0x70] sm:$0xff]
    %v672 = vld [vmem:[#allocation10 + $0x78] sm:$0xff]
    %v673 = vld [vmem:[%s9] sm:$0x3]
    %v675 = vlaneseq
    %v676 = vshrl.u32 %v675, 7
    %v677 = vsub.s32 0, %v676
    %v678 = vrot.slane %v673, %v677
    %v679 = vlaneseq
    %v680 = vshrl.u32 %v679, 7
    %v681 = vsub.s32 1, %v680
    %v682 = vrot.slane %v673, %v681
    %v701 = vunpack.c.l.b16 %v657
    %v702 = vunpack.c.h.b16 %v657
    %v703 = vunpack.c.l.b16 %v658
    %v704 = vunpack.c.h.b16 %v658
    %v705 = vunpack.c.l.b16 %v659
    %v706 = vunpack.c.h.b16 %v659
    %v707 = vunpack.c.l.b16 %v660
    %v708 = vunpack.c.h.b16 %v660
    %v709 = vunpack.c.l.b16 %v661
    %v710 = vunpack.c.h.b16 %v661
    %v711 = vunpack.c.l.b16 %v662
    %v712 = vunpack.c.h.b16 %v662
    %v713 = vunpack.c.l.b16 %v663
    %v714 = vunpack.c.h.b16 %v663
    %v715 = vunpack.c.l.b16 %v664
    %v716 = vunpack.c.h.b16 %v664
    %v717 = vunpack.c.l.b16 %v665
    %v718 = vunpack.c.h.b16 %v665
    %v719 = vunpack.c.l.b16 %v666
    %v720 = vunpack.c.h.b16 %v666
    %v721 = vunpack.c.l.b16 %v667
    %v722 = vunpack.c.h.b16 %v667
    %v723 = vunpack.c.l.b16 %v668
    %v724 = vunpack.c.h.b16 %v668
    %v725 = vunpack.c.l.b16 %v669
    %v726 = vunpack.c.h.b16 %v669
    %v727 = vunpack.c.l.b16 %v670
    %v728 = vunpack.c.h.b16 %v670
    %v729 = vunpack.c.l.b16 %v671
    %v730 = vunpack.c.h.b16 %v671
    %v731 = vunpack.c.l.b16 %v672
    %v732 = vunpack.c.h.b16 %v672
    %v733 = vpack.c.b16 %v703, %v701
    %v734 = vpack.c.b16 %v704, %v702
    %v735 = vpack.c.b16 %v707, %v705
    %v736 = vpack.c.b16 %v708, %v706
    %v737 = vpack.c.b16 %v711, %v709
    %v738 = vpack.c.b16 %v712, %v710
    %v739 = vpack.c.b16 %v715, %v713
    %v740 = vpack.c.b16 %v716, %v714
    %v741 = vpack.c.b16 %v719, %v717
    %v742 = vpack.c.b16 %v720, %v718
    %v743 = vpack.c.b16 %v723, %v721
    %v744 = vpack.c.b16 %v724, %v722
    %v745 = vpack.c.b16 %v727, %v725
    %v746 = vpack.c.b16 %v728, %v726
    %v747 = vpack.c.b16 %v731, %v729
    %v748 = vpack.c.b16 %v732, %v730
    %765 = vmatprep.subr.bf16.mxu0 %v734
    %766 = vmatpush1.bf16.msra.mxu0 %v733
    %767 = vmatprep.subr.bf16.mxu0 %v736
    %768 = vmatpush1.bf16.msra.mxu0 %v735
    %769 = vmatprep.subr.bf16.mxu0 %v738
    %770 = vmatpush1.bf16.msra.mxu0 %v737
    %771 = vmatprep.subr.bf16.mxu0 %v740
    %772 = vmatpush1.bf16.msra.mxu0 %v739
    %773 = vmatprep.subr.bf16.mxu0 %v742
    %774 = vmatpush1.bf16.msra.mxu0 %v741
    %775 = vmatprep.subr.bf16.mxu0 %v744
    %776 = vmatpush1.bf16.msra.mxu0 %v743
    %777 = vmatprep.subr.bf16.mxu0 %v746
    %778 = vmatpush1.bf16.msra.mxu0 %v745
    %779 = vmatprep.subr.bf16.mxu0 %v748
    %780 = vmatpush1.bf16.msra.mxu0 %v747
    %781 = vmatprep.subr.bf16.mxu0 0
    %782 = vmatpush1.bf16.msra.mxu0 0
    %783 = vmatprep.subr.bf16.mxu0 0
    %784 = vmatpush1.bf16.msra.mxu0 0
    %785 = vmatprep.subr.bf16.mxu0 0
    %786 = vmatpush1.bf16.msra.mxu0 0
    %787 = vmatprep.subr.bf16.mxu0 0
    %788 = vmatpush1.bf16.msra.mxu0 0
    %789 = vmatprep.subr.bf16.mxu0 0
    %790 = vmatpush1.bf16.msra.mxu0 0
    %791 = vmatprep.subr.bf16.mxu0 0
    %792 = vmatpush1.bf16.msra.mxu0 0
    %793 = vmatprep.subr.bf16.mxu0 0
    %794 = vmatpush1.bf16.msra.mxu0 0
    %795 = vmatprep.subr.bf16.mxu0 0
    %796 = vmatpush1.bf16.msra.mxu0 0
    %797 = vmatprep.mubr.bf16.mxu0 0
    %798 = vmatmul.mubr.bf16.gmra.mrb[0].mxu0 %v656
    %v799 = vpop.f32.mrb[0].mxu0
    %v800 = vadd.f32 %v678, %v799
    %v801 = vpop.f32.mrb[0].mxu0
    %v802 = vadd.f32 %v682, %v801
    %v803 = vpop.f32.mrb[0].mxu0
    %v804 = vpop.f32.mrb[0].mxu0
    %805 = vdwg.mxu0
    %v806 = vmax.f32 %v800, 0.0
    %v807 = vmax.f32 %v802, 0.0
    %v808 = vpack.c.bf16 %v806, %v806
    %v809 = vpack.c.bf16 %v807, %v807
    %v810 = vld [vmem:[#allocation11] sm:$0xf]
    %v811 = vld [vmem:[#allocation11 + $0x4] sm:$0xf]
    %v812 = vld [vmem:[#allocation11 + $0x8] sm:$0xf]
    %v813 = vld [vmem:[#allocation11 + $0xc] sm:$0xf]
    %v814 = vld [vmem:[#allocation11 + $0x10] sm:$0xf]
    %v815 = vld [vmem:[#allocation11 + $0x14] sm:$0xf]
    %v816 = vld [vmem:[#allocation11 + $0x18] sm:$0xf]
    %v817 = vld [vmem:[#allocation11 + $0x1c] sm:$0xf]
    %v818 = vld [vmem:[#allocation11 + $0x20] sm:$0xf]
    %v819 = vld [vmem:[#allocation11 + $0x24] sm:$0xf]
    %v820 = vld [vmem:[#allocation11 + $0x28] sm:$0xf]
    %v821 = vld [vmem:[#allocation11 + $0x2c] sm:$0xf]
    %v822 = vld [vmem:[#allocation11 + $0x30] sm:$0xf]
    %v823 = vld [vmem:[#allocation11 + $0x34] sm:$0xf]
    %v824 = vld [vmem:[#allocation11 + $0x38] sm:$0xf]
    %v825 = vld [vmem:[#allocation11 + $0x3c] sm:$0xf]
    %v826 = vld [vmem:[#allocation11 + $0x40] sm:$0xf]
    %v827 = vld [vmem:[#allocation11 + $0x44] sm:$0xf]
    %v828 = vld [vmem:[#allocation11 + $0x48] sm:$0xf]
    %v829 = vld [vmem:[#allocation11 + $0x4c] sm:$0xf]
    %v830 = vld [vmem:[#allocation11 + $0x50] sm:$0xf]
    %v831 = vld [vmem:[#allocation11 + $0x54] sm:$0xf]
    %v832 = vld [vmem:[#allocation11 + $0x58] sm:$0xf]
    %v833 = vld [vmem:[#allocation11 + $0x5c] sm:$0xf]
    %v834 = vld [vmem:[#allocation11 + $0x60] sm:$0xf]
    %v835 = vld [vmem:[#allocation11 + $0x64] sm:$0xf]
    %v836 = vld [vmem:[#allocation11 + $0x68] sm:$0xf]
    %v837 = vld [vmem:[#allocation11 + $0x6c] sm:$0xf]
    %v838 = vld [vmem:[#allocation11 + $0x70] sm:$0xf]
    %v839 = vld [vmem:[#allocation11 + $0x74] sm:$0xf]
    %v840 = vld [vmem:[#allocation11 + $0x78] sm:$0xf]
    %v841 = vld [vmem:[#allocation11 + $0x7c] sm:$0xf]
    %v842 = vld [vmem:[%s11] sm:$0x1]
    %v844 = vlaneseq
    %v845 = vshrl.u32 %v844, 7
    %v846 = vsub.s32 0, %v845
    %v847 = vrot.slane %v842, %v846
    %v881 = vunpack.c.l.b16 %v810
    %v882 = vunpack.c.l.b16 %v811
    %v883 = vunpack.c.l.b16 %v812
    %v884 = vunpack.c.l.b16 %v813
    %v885 = vunpack.c.l.b16 %v814
    %v886 = vunpack.c.l.b16 %v815
    %v887 = vunpack.c.l.b16 %v816
    %v888 = vunpack.c.l.b16 %v817
    %v889 = vunpack.c.l.b16 %v818
    %v890 = vunpack.c.l.b16 %v819
    %v891 = vunpack.c.l.b16 %v820
    %v892 = vunpack.c.l.b16 %v821
    %v893 = vunpack.c.l.b16 %v822
    %v894 = vunpack.c.l.b16 %v823
    %v895 = vunpack.c.l.b16 %v824
    %v896 = vunpack.c.l.b16 %v825
    %v897 = vunpack.c.l.b16 %v826
    %v898 = vunpack.c.l.b16 %v827
    %v899 = vunpack.c.l.b16 %v828
    %v900 = vunpack.c.l.b16 %v829
    %v901 = vunpack.c.l.b16 %v830
    %v902 = vunpack.c.l.b16 %v831
    %v903 = vunpack.c.l.b16 %v832
    %v904 = vunpack.c.l.b16 %v833
    %v905 = vunpack.c.l.b16 %v834
    %v906 = vunpack.c.l.b16 %v835
    %v907 = vunpack.c.l.b16 %v836
    %v908 = vunpack.c.l.b16 %v837
    %v909 = vunpack.c.l.b16 %v838
    %v910 = vunpack.c.l.b16 %v839
    %v911 = vunpack.c.l.b16 %v840
    %v912 = vunpack.c.l.b16 %v841
    %v913 = vpack.c.b16 %v882, %v881
    %v914 = vpack.c.b16 %v884, %v883
    %v915 = vpack.c.b16 %v886, %v885
    %v916 = vpack.c.b16 %v888, %v887
    %v917 = vpack.c.b16 %v890, %v889
    %v918 = vpack.c.b16 %v892, %v891
    %v919 = vpack.c.b16 %v894, %v893
    %v920 = vpack.c.b16 %v896, %v895
    %v921 = vpack.c.b16 %v898, %v897
    %v922 = vpack.c.b16 %v900, %v899
    %v923 = vpack.c.b16 %v902, %v901
    %v924 = vpack.c.b16 %v904, %v903
    %v925 = vpack.c.b16 %v906, %v905
    %v926 = vpack.c.b16 %v908, %v907
    %v927 = vpack.c.b16 %v910, %v909
    %v928 = vpack.c.b16 %v912, %v911
    %945 = vmatprep.subr.bf16.mxu0 0
    %946 = vmatpush1.bf16.msra.mxu0 %v913
    %947 = vmatprep.subr.bf16.mxu0 0
    %948 = vmatpush1.bf16.msra.mxu0 %v914
    %949 = vmatprep.subr.bf16.mxu0 0
    %950 = vmatpush1.bf16.msra.mxu0 %v915
    %951 = vmatprep.subr.bf16.mxu0 0
    %952 = vmatpush1.bf16.msra.mxu0 %v916
    %953 = vmatprep.subr.bf16.mxu0 0
    %954 = vmatpush1.bf16.msra.mxu0 %v917
    %955 = vmatprep.subr.bf16.mxu0 0
    %956 = vmatpush1.bf16.msra.mxu0 %v918
    %957 = vmatprep.subr.bf16.mxu0 0
    %958 = vmatpush1.bf16.msra.mxu0 %v919
    %959 = vmatprep.subr.bf16.mxu0 0
    %960 = vmatpush1.bf16.msra.mxu0 %v920
    %961 = vmatprep.subr.bf16.mxu0 0
    %962 = vmatpush1.bf16.msra.mxu0 %v921
    %963 = vmatprep.subr.bf16.mxu0 0
    %964 = vmatpush1.bf16.msra.mxu0 %v922
    %965 = vmatprep.subr.bf16.mxu0 0
    %966 = vmatpush1.bf16.msra.mxu0 %v923
    %967 = vmatprep.subr.bf16.mxu0 0
    %968 = vmatpush1.bf16.msra.mxu0 %v924
    %969 = vmatprep.subr.bf16.mxu0 0
    %970 = vmatpush1.bf16.msra.mxu0 %v925
    %971 = vmatprep.subr.bf16.mxu0 0
    %972 = vmatpush1.bf16.msra.mxu0 %v926
    %973 = vmatprep.subr.bf16.mxu0 0
    %974 = vmatpush1.bf16.msra.mxu0 %v927
    %975 = vmatprep.subr.bf16.mxu0 0
    %976 = vmatpush1.bf16.msra.mxu0 %v928
    %977 = vmatprep.mubr.bf16.mxu0 %v809
    %978 = vmatmul.mubr.bf16.gmra.mrb[0].mxu0 %v808
    %v979 = vpop.f32.mrb[0].mxu0
    %v980 = vadd.f32 %v847, %v979
    %v981 = vpop.f32.mrb[0].mxu0
    %v982 = vpop.f32.mrb[0].mxu0
    %v983 = vpop.f32.mrb[0].mxu0
    %984 = vdwg.mxu0
    %v985 = vmul.f32 %v980, %v137
    %v986 = vpack.c.bf16 %v985, %v985
    %987 = vst [vmem:[#allocation13] sm:$0xf] %v986
    // Predicated region
    $region74: #{tpu_custom_call.1} parent=1 // pred_check
      _
    $region75: #{tpu_custom_call.1} parent=1 // pred_check_branch
      %989 = sbr.rel (0) target = $region77
    $region76: #{tpu_custom_call.1} parent=1 // pred_region
      %s991 = ssub.s32 64, 64
      %992 = vsyncadd [#allocation4], %s991
      %s994 = sshll.u32 [#allocation13], 4
      %s995 = int_to_ptr.vmem [resolvable:$true] %s994
      %997 = dma.vmem_to_hbm [thread:$0]  %s995, 64, %s12, [#allocation4]
    $region77: #{tpu_custom_call.1} parent=1 // pred_fallthru
      _
    // Predicated region
    $region78: #{tpu_custom_call.1} parent=1 // pred_check
      _
    $region79: #{tpu_custom_call.1} parent=1 // pred_check_branch
      %999 = sbr.rel (0) target = $region81
    $region80: #{tpu_custom_call.1} parent=1 // pred_region
      %1000 = dma.done [#allocation4], 64
    $region81: #{tpu_custom_call.1} parent=1 // pred_fallthru
      _
    %1001 = vsyncpa [#allocation3], 1
    %1002 = vsyncpa [#allocation6], 1
    %1003 = vsyncpa [#allocation9], 1
    %1004 = vsyncpa [#allocation12], 1
    %1005 = vsyncpa [#allocation4], 1

</llo_original>
